<compile_context>
chip_gen: v6e
topology: v6e:2x2x1
jax: 0.10.0
libtpu: 0.0.40
codegen_flags: <defaults>
</compile_context>

<pallas_src>
import jax
import jax.numpy as jnp
from jax.experimental import pallas as pl
from jax.experimental.pallas import tpu as pltpu


def _sum_logsumexp_kernel(x_ref, lw_ref, o_ref):
    """Weighted logsumexp over the input-channel axis.

    x_ref : (1, IC, L)   input log-likelihoods, lane-dense over (d, r)
    lw_ref: (IC, OC, L)  log_softmax(weights) in the same lane layout (f32)
    o_ref : (1, OC, L)   output log-likelihoods
    """
    num_in = x_ref.shape[1]

    def slab(ic):
        # (OC, L) slab: x[:, ic, :] broadcast over OC plus the ic-th weight slab.
        x_ic = x_ref[0, ic:ic + 1, :].astype(jnp.float32)     # (1, L)
        return x_ic + lw_ref[ic].astype(jnp.float32)          # (OC, L)

    # Pass 1: running max over the (small) IC axis — unrolled, stays on the VPU.
    m = slab(0)
    for ic in range(1, num_in):
        m = jnp.maximum(m, slab(ic))

    # Pass 2: sum of exp (exp goes to the EUP slot; adds stay on the VPU).
    s = jnp.exp(slab(0) - m)
    for ic in range(1, num_in):
        s = s + jnp.exp(slab(ic) - m)

    o_ref[0] = (m + jnp.log(s)).astype(o_ref.dtype)


def _choose_lane_tile(L, ic, oc, x_itemsize):
    """Pick a lane tile (multiple of 128) and padded lane extent for the grid."""
    if L <= 128:
        # Full-extent last dim is legal even when < 128 / not 128-aligned.
        return L, L
    l_pad = ((L + 127) // 128) * 128
    n_chunks = l_pad // 128
    # Rough per-lane VMEM bytes for one block set: x (IC) + weights (IC*OC f32) + out (OC f32).
    per_lane = ic * x_itemsize + ic * oc * 4 + oc * 4
    budget = 8 * 1024 * 1024  # stay well under the 16/32 MiB scoped VMEM defaults (v5e/v6e/v7x)
    chunks_per_tile = 1
    for c in range(min(8, n_chunks), 0, -1):
        if n_chunks % c == 0 and 2 * c * 128 * per_lane <= budget:
            chunks_per_tile = c
            break
    return chunks_per_tile * 128, l_pad


def sum_layer_forward(x, weights):
    """x: [N, D, IC, R]; weights: [D, IC, OC, R] -> [N, D, OC, R]."""
    n, d, ic, r = x.shape
    dw, icw, oc, rw = weights.shape
    assert (dw, icw, rw) == (d, ic, r), "weights shape mismatch"

    out_dtype = jnp.result_type(x.dtype, weights.dtype)

    # log_softmax over IC, once (no batch dependence); keep in f32 for accuracy.
    logw = jax.nn.log_softmax(weights.astype(jnp.float32), axis=1)  # [D, IC, OC, R]

    # Lane-dense layout: flatten (D, R) into the last axis.
    L = d * r
    x_l = jnp.transpose(x, (0, 2, 1, 3)).reshape(n, ic, L)          # [N, IC, L]
    w_l = jnp.transpose(logw, (1, 2, 0, 3)).reshape(ic, oc, L)       # [IC, OC, L]

    lane_tile, l_pad = _choose_lane_tile(L, ic, oc, jnp.dtype(x.dtype).itemsize)
    if l_pad != L:
        # Zero-padding only along the lane axis; padded lanes produce finite
        # garbage (log(IC)) that is sliced off below.
        x_l = jnp.pad(x_l, ((0, 0), (0, 0), (0, l_pad - L)))
        w_l = jnp.pad(w_l, ((0, 0), (0, 0), (0, l_pad - L)))
    num_tiles = l_pad // lane_tile

    flops = int(5 * n * ic * oc * L)          # adds/maxes/subs per output element
    transcendentals = int(n * ic * oc * L)    # one exp per (ic, oc, lane)
    bytes_accessed = int(
        x_l.size * jnp.dtype(x.dtype).itemsize
        + w_l.size * 4
        + n * oc * l_pad * jnp.dtype(out_dtype).itemsize
    )

    out_l = pl.pallas_call(
        _sum_logsumexp_kernel,
        out_shape=jax.ShapeDtypeStruct((n, oc, l_pad), out_dtype),
        grid_spec=pltpu.PrefetchScalarGridSpec(
            num_scalar_prefetch=0,
            grid=(n, num_tiles),
            in_specs=[
                pl.BlockSpec((1, ic, lane_tile), lambda b, t: (b, 0, t)),
                pl.BlockSpec((ic, oc, lane_tile), lambda b, t: (0, 0, t)),
            ],
            out_specs=pl.BlockSpec((1, oc, lane_tile), lambda b, t: (b, 0, t)),
        ),
        compiler_params=pltpu.CompilerParams(
            dimension_semantics=("parallel", "parallel"),
        ),
        cost_estimate=pl.CostEstimate(
            flops=flops,
            transcendentals=transcendentals,
            bytes_accessed=bytes_accessed,
        ),
    )(x_l, w_l)

    # [N, OC, L_pad] -> drop padding -> [N, OC, D, R] -> [N, D, OC, R]
    out = out_l[:, :, :L].reshape(n, oc, d, r)
    return jnp.transpose(out, (0, 2, 1, 3))


class SumPallas:
    """JAX/Pallas equivalent of simple_einet.layers.Sum (forward only, eval mode)."""

    def __init__(self, num_sums_in, num_features, num_sums_out,
                 num_repetitions=1, dropout=0.0, *, weights=None, key=None):
        assert num_sums_in >= 1 and num_features >= 1
        assert num_sums_out >= 1 and num_repetitions >= 1
        assert 0.0 <= dropout <= 1.0
        self.num_sums_in = num_sums_in
        self.num_features = num_features
        self.num_sums_out = num_sums_out
        self.num_repetitions = num_repetitions
        self.dropout = dropout  # unused in eval forward
        if weights is None:
            key = jax.random.PRNGKey(0) if key is None else key
            weights = jax.random.normal(
                key, (num_features, num_sums_in, num_sums_out, num_repetitions),
                dtype=jnp.float32)
        self.weights = weights
        self.out_shape = f"(N, {num_features}, {num_sums_out}, {num_repetitions})"

    def __call__(self, x):
        return sum_layer_forward(x, self.weights)


def _reference(x, weights):
    """Pure-JAX reference mirroring the PyTorch Sum.forward."""
    logw = jax.nn.log_softmax(weights.astype(jnp.float32), axis=1)   # [D, IC, OC, R]
    z = x.astype(jnp.float32)[:, :, :, None, :] + logw[None]         # [N, D, IC, OC, R]
    return jax.scipy.special.logsumexp(z, axis=2)                    # [N, D, OC, R]


if __name__ == "__main__":
    key = jax.random.PRNGKey(0)
    kx, kw, kx2, kw2 = jax.random.split(key, 4)

    # Main config: batch=2, features=64, in-sums=4, out-sums=4, repetitions=2
    # -> lane axis D*R = 128 (lane-dense, unmasked stores).
    N, D, IC, OC, R = 2, 64, 4, 4, 2
    x = jax.random.normal(kx, (N, D, IC, R), dtype=jnp.float32)
    w = jax.random.normal(kw, (D, IC, OC, R), dtype=jnp.float32)
    layer = SumPallas(IC, D, OC, num_repetitions=R, weights=w)
    out = jax.block_until_ready(layer(x))
    ref = _reference(x, w)
    assert out.shape == (N, D, OC, R), out.shape
    assert jnp.allclose(out, ref.astype(out.dtype), atol=1e-5, rtol=1e-5), \
        "mismatch vs reference (f32 path)"

    # Small / ragged lane-axis config (D*R = 18 < 128) with bf16 inputs
    # exercises the full-extent block path and the f32 accumulation.
    N2, D2, IC2, OC2, R2 = 2, 9, 3, 5, 2
    x2 = jax.random.normal(kx2, (N2, D2, IC2, R2), dtype=jnp.bfloat16)
    w2 = jax.random.normal(kw2, (D2, IC2, OC2, R2), dtype=jnp.float32)
    layer2 = SumPallas(IC2, D2, OC2, num_repetitions=R2, weights=w2)
    out2 = jax.block_until_ready(layer2(x2))
    ref2 = _reference(x2, w2)
    assert out2.shape == (N2, D2, OC2, R2), out2.shape
    assert jnp.allclose(out2, ref2, atol=1e-4, rtol=1e-4), \
        "mismatch vs reference (bf16 path)"

    print("KERNEL_OK")
</pallas_src>

<mosaic_0001>
module attributes {stable_mosaic.version = 11 : i64} {
  func.func @_sum_logsumexp_kernel(%arg0: i32, %arg1: i32, %arg2: memref<1x4x128xf32, #tpu.memory_space<vmem>>, %arg3: memref<4x4x128xf32, #tpu.memory_space<vmem>>, %arg4: memref<1x4x128xf32, #tpu.memory_space<vmem>>) attributes {dimension_semantics = [#tpu.dimension_semantics<parallel>, #tpu.dimension_semantics<parallel>], iteration_bounds = array<i64: 2, 1>, scalar_prefetch = 0 : i64, scratch_operands = 0 : i64, tpu.core_type = #tpu.core_type<tc>, window_params = [{transform_indices = @transform_0, window_bounds = array<i64: 1, 4, 128>}, {transform_indices = @transform_1, window_bounds = array<i64: 4, 4, 128>}, {transform_indices = @transform_2, window_bounds = array<i64: 1, 4, 128>}]} {
    %c0 = arith.constant 0 : index
    %c0_0 = arith.constant 0 : index
    %c0_1 = arith.constant 0 : index
    %0 = vector.load %arg2[%c0, %c0_0, %c0_1] : memref<1x4x128xf32, #tpu.memory_space<vmem>>, vector<1x1x128xf32>
    %1 = vector.shape_cast %0 : vector<1x1x128xf32> to vector<1x128xf32>
    %c0_2 = arith.constant 0 : index
    %c0_3 = arith.constant 0 : index
    %c0_4 = arith.constant 0 : index
    %2 = vector.load %arg3[%c0_2, %c0_3, %c0_4] : memref<4x4x128xf32, #tpu.memory_space<vmem>>, vector<1x4x128xf32>
    %3 = vector.shape_cast %2 : vector<1x4x128xf32> to vector<4x128xf32>
    %4 = vector.broadcast %1 : vector<1x128xf32> to vector<4x128xf32>
    %5 = arith.addf %4, %3 : vector<4x128xf32>
    %c0_5 = arith.constant 0 : index
    %c1 = arith.constant 1 : index
    %c0_6 = arith.constant 0 : index
    %6 = vector.load %arg2[%c0_5, %c1, %c0_6] : memref<1x4x128xf32, #tpu.memory_space<vmem>>, vector<1x1x128xf32>
    %7 = vector.shape_cast %6 : vector<1x1x128xf32> to vector<1x128xf32>
    %c1_7 = arith.constant 1 : index
    %c0_8 = arith.constant 0 : index
    %c0_9 = arith.constant 0 : index
    %8 = vector.load %arg3[%c1_7, %c0_8, %c0_9] : memref<4x4x128xf32, #tpu.memory_space<vmem>>, vector<1x4x128xf32>
    %9 = vector.shape_cast %8 : vector<1x4x128xf32> to vector<4x128xf32>
    %10 = vector.broadcast %7 : vector<1x128xf32> to vector<4x128xf32>
    %11 = arith.addf %10, %9 : vector<4x128xf32>
    %12 = arith.maximumf %5, %11 : vector<4x128xf32>
    %c0_10 = arith.constant 0 : index
    %c2 = arith.constant 2 : index
    %c0_11 = arith.constant 0 : index
    %13 = vector.load %arg2[%c0_10, %c2, %c0_11] : memref<1x4x128xf32, #tpu.memory_space<vmem>>, vector<1x1x128xf32>
    %14 = vector.shape_cast %13 : vector<1x1x128xf32> to vector<1x128xf32>
    %c2_12 = arith.constant 2 : index
    %c0_13 = arith.constant 0 : index
    %c0_14 = arith.constant 0 : index
    %15 = vector.load %arg3[%c2_12, %c0_13, %c0_14] : memref<4x4x128xf32, #tpu.memory_space<vmem>>, vector<1x4x128xf32>
    %16 = vector.shape_cast %15 : vector<1x4x128xf32> to vector<4x128xf32>
    %17 = vector.broadcast %14 : vector<1x128xf32> to vector<4x128xf32>
    %18 = arith.addf %17, %16 : vector<4x128xf32>
    %19 = arith.maximumf %12, %18 : vector<4x128xf32>
    %c0_15 = arith.constant 0 : index
    %c3 = arith.constant 3 : index
    %c0_16 = arith.constant 0 : index
    %20 = vector.load %arg2[%c0_15, %c3, %c0_16] : memref<1x4x128xf32, #tpu.memory_space<vmem>>, vector<1x1x128xf32>
    %21 = vector.shape_cast %20 : vector<1x1x128xf32> to vector<1x128xf32>
    %c3_17 = arith.constant 3 : index
    %c0_18 = arith.constant 0 : index
    %c0_19 = arith.constant 0 : index
    %22 = vector.load %arg3[%c3_17, %c0_18, %c0_19] : memref<4x4x128xf32, #tpu.memory_space<vmem>>, vector<1x4x128xf32>
    %23 = vector.shape_cast %22 : vector<1x4x128xf32> to vector<4x128xf32>
    %24 = vector.broadcast %21 : vector<1x128xf32> to vector<4x128xf32>
    %25 = arith.addf %24, %23 : vector<4x128xf32>
    %26 = arith.maximumf %19, %25 : vector<4x128xf32>
    %c0_20 = arith.constant 0 : index
    %c0_21 = arith.constant 0 : index
    %c0_22 = arith.constant 0 : index
    %27 = vector.load %arg2[%c0_20, %c0_21, %c0_22] : memref<1x4x128xf32, #tpu.memory_space<vmem>>, vector<1x1x128xf32>
    %28 = vector.shape_cast %27 : vector<1x1x128xf32> to vector<1x128xf32>
    %c0_23 = arith.constant 0 : index
    %c0_24 = arith.constant 0 : index
    %c0_25 = arith.constant 0 : index
    %29 = vector.load %arg3[%c0_23, %c0_24, %c0_25] : memref<4x4x128xf32, #tpu.memory_space<vmem>>, vector<1x4x128xf32>
    %30 = vector.shape_cast %29 : vector<1x4x128xf32> to vector<4x128xf32>
    %31 = vector.broadcast %28 : vector<1x128xf32> to vector<4x128xf32>
    %32 = arith.addf %31, %30 : vector<4x128xf32>
    %33 = arith.subf %32, %26 : vector<4x128xf32>
    %34 = math.exp %33 : vector<4x128xf32>
    %c0_26 = arith.constant 0 : index
    %c1_27 = arith.constant 1 : index
    %c0_28 = arith.constant 0 : index
    %35 = vector.load %arg2[%c0_26, %c1_27, %c0_28] : memref<1x4x128xf32, #tpu.memory_space<vmem>>, vector<1x1x128xf32>
    %36 = vector.shape_cast %35 : vector<1x1x128xf32> to vector<1x128xf32>
    %c1_29 = arith.constant 1 : index
    %c0_30 = arith.constant 0 : index
    %c0_31 = arith.constant 0 : index
    %37 = vector.load %arg3[%c1_29, %c0_30, %c0_31] : memref<4x4x128xf32, #tpu.memory_space<vmem>>, vector<1x4x128xf32>
    %38 = vector.shape_cast %37 : vector<1x4x128xf32> to vector<4x128xf32>
    %39 = vector.broadcast %36 : vector<1x128xf32> to vector<4x128xf32>
    %40 = arith.addf %39, %38 : vector<4x128xf32>
    %41 = arith.subf %40, %26 : vector<4x128xf32>
    %42 = math.exp %41 : vector<4x128xf32>
    %43 = arith.addf %34, %42 : vector<4x128xf32>
    %c0_32 = arith.constant 0 : index
    %c2_33 = arith.constant 2 : index
    %c0_34 = arith.constant 0 : index
    %44 = vector.load %arg2[%c0_32, %c2_33, %c0_34] : memref<1x4x128xf32, #tpu.memory_space<vmem>>, vector<1x1x128xf32>
    %45 = vector.shape_cast %44 : vector<1x1x128xf32> to vector<1x128xf32>
    %c2_35 = arith.constant 2 : index
    %c0_36 = arith.constant 0 : index
    %c0_37 = arith.constant 0 : index
    %46 = vector.load %arg3[%c2_35, %c0_36, %c0_37] : memref<4x4x128xf32, #tpu.memory_space<vmem>>, vector<1x4x128xf32>
    %47 = vector.shape_cast %46 : vector<1x4x128xf32> to vector<4x128xf32>
    %48 = vector.broadcast %45 : vector<1x128xf32> to vector<4x128xf32>
    %49 = arith.addf %48, %47 : vector<4x128xf32>
    %50 = arith.subf %49, %26 : vector<4x128xf32>
    %51 = math.exp %50 : vector<4x128xf32>
    %52 = arith.addf %43, %51 : vector<4x128xf32>
    %c0_38 = arith.constant 0 : index
    %c3_39 = arith.constant 3 : index
    %c0_40 = arith.constant 0 : index
    %53 = vector.load %arg2[%c0_38, %c3_39, %c0_40] : memref<1x4x128xf32, #tpu.memory_space<vmem>>, vector<1x1x128xf32>
    %54 = vector.shape_cast %53 : vector<1x1x128xf32> to vector<1x128xf32>
    %c3_41 = arith.constant 3 : index
    %c0_42 = arith.constant 0 : index
    %c0_43 = arith.constant 0 : index
    %55 = vector.load %arg3[%c3_41, %c0_42, %c0_43] : memref<4x4x128xf32, #tpu.memory_space<vmem>>, vector<1x4x128xf32>
    %56 = vector.shape_cast %55 : vector<1x4x128xf32> to vector<4x128xf32>
    %57 = vector.broadcast %54 : vector<1x128xf32> to vector<4x128xf32>
    %58 = arith.addf %57, %56 : vector<4x128xf32>
    %59 = arith.subf %58, %26 : vector<4x128xf32>
    %60 = math.exp %59 : vector<4x128xf32>
    %61 = arith.addf %52, %60 : vector<4x128xf32>
    %62 = math.log %61 : vector<4x128xf32>
    %63 = arith.addf %26, %62 : vector<4x128xf32>
    %c0_44 = arith.constant 0 : index
    %c0_45 = arith.constant 0 : index
    %c0_46 = arith.constant 0 : index
    %64 = vector.load %arg4[%c0_44, %c0_45, %c0_46] : memref<1x4x128xf32, #tpu.memory_space<vmem>>, vector<1x4x128xf32>
    %65 = vector.shape_cast %64 : vector<1x4x128xf32> to vector<4x128xf32>
    %66 = vector.shape_cast %63 : vector<4x128xf32> to vector<1x4x128xf32>
    tpu.vector_store %arg4[%c0_44, %c0_45, %c0_46], %66 {strides = array<i32>} : memref<1x4x128xf32, #tpu.memory_space<vmem>>, vector<1x4x128xf32>,
    return
  }
  func.func @transform_0(%arg0: i32, %arg1: i32) -> (i32, i32, i32) {
    %c0_i32 = arith.constant 0 : i32
    %c0_i32_0 = arith.constant 0 : i32
    return %arg0, %c0_i32, %arg1 : i32, i32, i32
  }
  func.func @transform_1(%arg0: i32, %arg1: i32) -> (i32, i32, i32) {
    %c0_i32 = arith.constant 0 : i32
    %c0_i32_0 = arith.constant 0 : i32
    %c0_i32_1 = arith.constant 0 : i32
    return %c0_i32, %c0_i32_0, %arg1 : i32, i32, i32
  }
  func.func @transform_2(%arg0: i32, %arg1: i32) -> (i32, i32, i32) {
    %c0_i32 = arith.constant 0 : i32
    %c0_i32_0 = arith.constant 0 : i32
    return %arg0, %c0_i32, %arg1 : i32, i32, i32
  }
}

</mosaic_0001>

<llo_original>
// kernel: tpu_custom_call.1
$region0: #{tpu_custom_call.1}
  #allocation0 [shape = 'u32[]', space=smem, size = 0x4, offset = 0x4, fixed_abs, tag = 'smem constant byte address 0x4 - core index']
  #allocation1 [shape = 'u32[144,128]{1,0:T(1,128)}', space=vmem, size = 0x12000, scoped, tag = 'internal scratch']
  %s0 = inlined_call_operand.hbm [shape: f32[2,4,128], index: 0, kind: input, shape index: {}]
  %s1 = inlined_call_operand.hbm [shape: f32[4,4,128], index: 1, kind: input, shape index: {}]
  %s2 = inlined_call_operand.hbm [shape: f32[2,4,128], index: 2, kind: output, shape index: {}]
  %s3 = sld [smem:[#allocation0]]
  $region49: #{tpu_custom_call.1} parent=0
    _
  %s5 = ssub.s32 1, %s3
  %s6 = scalar_select 0, %s5, %s3
  $region1: #{tpu_custom_call.1} parent=0
    #allocation2 [shape = 'u8[4096]{0}', space=vmem, size = 0x1000, scoped, tag = 'input window, operand 0']
    #allocation3 [shape = 's32[2]{0}', space=sflag, size = 0x8, scoped, tag = 'scoped memory for tpu_custom_call.1']
    #allocation4 [shape = 's32[2]{0}', space=sflag, size = 0x8, scoped, tag = 'scoped memory for tpu_custom_call.1']
    #allocation5 [shape = 'u8[8192]{0}', space=vmem, size = 0x2000, scoped, tag = 'input window, operand 1, single buffered']
    #allocation6 [shape = 's32[1]{0}', space=sflag, size = 0x4, scoped, tag = 'scoped memory for tpu_custom_call.1']
    #allocation7 [shape = 'u8[4096]{0}', space=vmem, size = 0x1000, scoped, tag = 'output window, operand 0']
    %7 = vsyncpa [#allocation3], 0
    %s8 = scalar_lea.sflag [#allocation3], 1
    %9 = vsyncpa %s8, 0
    %10 = vsyncpa [#allocation6], 0
    %11 = vsyncpa [#allocation4], 0
    %s12 = scalar_lea.sflag [#allocation4], 1
    %13 = vsyncpa %s12, 0
    loop: start=0, step=1, limit=4
    $region2: #{tpu_custom_call.1} parent=1 // loop_pre_header
      _
    $region3: #{tpu_custom_call.1} parent=1 // loop_header
      %s15 = sphi 0, %s19
      %p16 = scmp.ge.s32.totalorder %s15, 4
      %s22 = sphi 0, %s34
      %s23 = sphi 0, %s30
      %s24 = sphi 0, %s22
      %s25 = sphi 0, %s23
      %s26 = sphi 0, %s24
      %s27 = sphi 0, %s25
      %s39 = sphi 0, %s41
      %s42 = sphi 0, %s39
      %s43 = sphi 0, %s42
      %s59 = sphi 0, %s43
      %s65 = sphi 0, %s67
      %s68 = sphi 0, %s65
      %s69 = sphi 0, %s68
      %s85 = sphi 0, %s69
      %s93 = sphi 0, %s95
      %s96 = sphi 0, %s93
      %s97 = sphi 0, %s96
      %s113 = sphi 0, %s97
    $region4: #{tpu_custom_call.1} parent=1 // loop_header_branch
      %18 = sbr.rel (%p16) target = $region8
    $region5: #{tpu_custom_call.1} parent=1 // loop_body
      %s20 = ssub.s32 %s15, 1
      %s21 = ssub.s32 %s15, 2
      %s28 = sadd.s32 1, %s23
      %p29 = scmp.ge.s32.totalorder %s28, 1
      %s30 = scalar_select %p29, 0, %s28
      %s31 = sadd.s32 1, %s22
      %s32 = scalar_select %p29, %s31, %s22
      %p33 = scmp.ge.s32.totalorder %s32, 2
      %s34 = scalar_select %p33, 0, %s32
      %s35 = ssub.s32 %s22, %s34
      %s36 = ssub.s32 %s23, %s30
      %s37 = sor.u32 %s35, %s36
      %p38 = scmp.eq.s32.totalorder %s37, 0
      %s40 = sadd.s32 %s39, 1
      %s41 = scalar_select %p38, %s39, %s40
      %p44 = pneg %p38
      %p45 = scmp.eq.s32.totalorder %s15, 1
      %p46 = por %p44, %p45
      %p47 = scmp.ne.s32.totalorder %s39, %s42
      %p48 = scmp.eq.s32.totalorder %s15, 0
      %p49 = por %p47, %p48
      %p50 = scmp.ne.s32.totalorder %s39, %s42
      %p51 = scmp.eq.s32.totalorder %s20, 1
      %p52 = por %p50, %p51
      %p53 = scmp.ne.s32.totalorder %s42, %s43
      %p54 = scmp.eq.s32.totalorder %s20, 0
      %p55 = por %p53, %p54
      %p56 = scmp.ne.s32.totalorder %s42, %s43
      %p57 = scmp.eq.s32.totalorder %s21, 1
      %p58 = por %p56, %p57
      %p60 = scmp.ne.s32.totalorder %s43, %s59
      %p61 = scmp.eq.s32.totalorder %s21, 0
      %p62 = por %p60, %p61
      %s63 = ssub.s32 %s23, %s30
      %p64 = scmp.eq.s32.totalorder %s63, 0
      %s66 = sadd.s32 %s65, 1
      %s67 = scalar_select %p64, %s65, %s66
      %p70 = pneg %p64
      %p71 = scmp.eq.s32.totalorder %s15, 1
      %p72 = por %p70, %p71
      %p73 = scmp.ne.s32.totalorder %s65, %s68
      %p74 = scmp.eq.s32.totalorder %s15, 0
      %p75 = por %p73, %p74
      %p76 = scmp.ne.s32.totalorder %s65, %s68
      %p77 = scmp.eq.s32.totalorder %s20, 1
      %p78 = por %p76, %p77
      %p79 = scmp.ne.s32.totalorder %s68, %s69
      %p80 = scmp.eq.s32.totalorder %s20, 0
      %p81 = por %p79, %p80
      %p82 = scmp.ne.s32.totalorder %s68, %s69
      %p83 = scmp.eq.s32.totalorder %s21, 1
      %p84 = por %p82, %p83
      %p86 = scmp.ne.s32.totalorder %s69, %s85
      %p87 = scmp.eq.s32.totalorder %s21, 0
      %p88 = por %p86, %p87
      %s89 = ssub.s32 %s22, %s34
      %s90 = ssub.s32 %s23, %s30
      %s91 = sor.u32 %s89, %s90
      %p92 = scmp.eq.s32.totalorder %s91, 0
      %s94 = sadd.s32 %s93, 1
      %s95 = scalar_select %p92, %s93, %s94
      %p98 = pneg %p92
      %p99 = scmp.eq.s32.totalorder %s15, 1
      %p100 = por %p98, %p99
      %p101 = scmp.ne.s32.totalorder %s93, %s96
      %p102 = scmp.eq.s32.totalorder %s15, 0
      %p103 = por %p101, %p102
      %p104 = scmp.ne.s32.totalorder %s93, %s96
      %p105 = scmp.eq.s32.totalorder %s20, 1
      %p106 = por %p104, %p105
      %p107 = scmp.ne.s32.totalorder %s96, %s97
      %p108 = scmp.eq.s32.totalorder %s20, 0
      %p109 = por %p107, %p108
      %p110 = scmp.ne.s32.totalorder %s96, %s97
      %p111 = scmp.eq.s32.totalorder %s21, 1
      %p112 = por %p110, %p111
      %p114 = scmp.ne.s32.totalorder %s97, %s113
      %p115 = scmp.eq.s32.totalorder %s21, 0
      %p116 = por %p114, %p115
      %p117 = scmp.le.s32.totalorder 1, %s15
      %p118 = scmp.lt.s32.totalorder %s15, 3
      %p119 = pnand %p117, %p118
      %p120 = pneg %p119
      // Predicated region
      $region9: #{tpu_custom_call.1} parent=5 // pred_check
        _
      $region10: #{tpu_custom_call.1} parent=5 // pred_check_branch
        %122 = sbr.rel (%p119) target = $region12
      $region11: #{tpu_custom_call.1} parent=5 // pred_region
        %s123 = ssub.s32 %s15, 1
        // Predicated region
        $region13: #{tpu_custom_call.1} parent=11 // pred_check
          %p124 = pneg %p81
        $region14: #{tpu_custom_call.1} parent=11 // pred_check_branch
          %126 = sbr.rel (%p124) target = $region16
        $region15: #{tpu_custom_call.1} parent=11 // pred_region
          %s128 = ssub.s32 256, 256
          %129 = vsyncadd [#allocation6], %s128
          %s130 = smul.addr %s25, 64
          %s131 = scalar_lea.hbm %s1, %s130
          %s132 = sshll.u32 [#allocation5], 4
          %s133 = int_to_ptr.vmem [resolvable:$true] %s132
          %138 = dma.hbm_to_vmem [thread:$0]  %s131, 256, %s133, [#allocation6], 64, 64, 4
        $region16: #{tpu_custom_call.1} parent=11 // pred_fallthru
          _
      $region12: #{tpu_custom_call.1} parent=5 // pred_fallthru
        _
      %p139 = scmp.lt.s32.totalorder %s15, 2
      // Predicated region
      $region17: #{tpu_custom_call.1} parent=5 // pred_check
        %p140 = pneg %p139
      $region18: #{tpu_custom_call.1} parent=5 // pred_check_branch
        %142 = sbr.rel (%p140) target = $region20
      $region19: #{tpu_custom_call.1} parent=5 // pred_region
        // Predicated region
        $region21: #{tpu_custom_call.1} parent=19 // pred_check
          %p143 = pneg %p49
        $region22: #{tpu_custom_call.1} parent=19 // pred_check_branch
          %145 = sbr.rel (%p143) target = $region24
        $region23: #{tpu_custom_call.1} parent=19 // pred_region
          %s146 = sand.u32 %s39, 1
          %s147 = scalar_lea.sflag [#allocation3], %s146
          %s148 = sand.u32 %s39, 1
          %s149 = smul.addr %s148, 4
          %s150 = scalar_lea.vmem [#allocation2], %s149
          %s152 = ssub.s32 64, 64
          %153 = vsyncadd %s147, %s152
          %s154 = sadd.s32 %s23, %s22
          %s155 = smul.addr %s154, 64
          %s156 = scalar_lea.hbm %s0, %s155
          %s158 = sshll.u32 %s150, 4
          %s159 = int_to_ptr.vmem [resolvable:$true] %s158
          %161 = dma.hbm_to_vmem [thread:$0]  %s156, 64, %s159, %s147
        $region24: #{tpu_custom_call.1} parent=19 // pred_fallthru
          _
      $region20: #{tpu_custom_call.1} parent=5 // pred_fallthru
        _
      %p162 = scmp.le.s32.totalorder 1, %s15
      %p163 = scmp.lt.s32.totalorder %s15, 3
      %p164 = pnand %p162, %p163
      %p165 = pneg %p164
      // Predicated region
      $region25: #{tpu_custom_call.1} parent=5 // pred_check
        _
      $region26: #{tpu_custom_call.1} parent=5 // pred_check_branch
        %167 = sbr.rel (%p164) target = $region28
      $region27: #{tpu_custom_call.1} parent=5 // pred_region
        %s168 = ssub.s32 %s15, 1
        %s169 = sand.u32 %s42, 1
        %s170 = scalar_lea.sflag [#allocation3], %s169
        %s171 = sand.u32 %s42, 1
        %s172 = smul.addr %s171, 4
        %s173 = scalar_lea.vmem [#allocation2], %s172
        // Predicated region
        $region29: #{tpu_custom_call.1} parent=27 // pred_check
          %p174 = pneg %p55
        $region30: #{tpu_custom_call.1} parent=27 // pred_check_branch
          %176 = sbr.rel (%p174) target = $region32
        $region31: #{tpu_custom_call.1} parent=27 // pred_region
          %177 = dma.done %s170, 64
        $region32: #{tpu_custom_call.1} parent=27 // pred_fallthru
          _
        // Predicated region
        $region33: #{tpu_custom_call.1} parent=27 // pred_check
          %p178 = pneg %p81
        $region34: #{tpu_custom_call.1} parent=27 // pred_check_branch
          %180 = sbr.rel (%p178) target = $region36
        $region35: #{tpu_custom_call.1} parent=27 // pred_region
          %181 = dma.done [#allocation6], 256
        $region36: #{tpu_custom_call.1} parent=27 // pred_fallthru
          _
        %s182 = sand.u32 %s42, 1
        %s183 = scalar_lea.sflag [#allocation3], %s182
        %s184 = sand.u32 %s42, 1
        %s185 = smul.addr %s184, 4
        %s186 = scalar_lea.vmem [#allocation2], %s185
        %p187 = pneg %p55
        %p188 = pneg %p52
        %p189 = pneg %p81
        %p190 = pneg %p78
        %p191 = pneg %p109
        %p192 = pneg %p106
        %s193 = sand.u32 %s96, 1
        %s194 = scalar_lea.sflag [#allocation4], %s193
        %s195 = sand.u32 %s96, 1
        %s196 = smul.addr %s195, 4
        %s197 = scalar_lea.vmem [#allocation7], %s196
        %v198 = vld [vmem:[%s173] sm:$0x1]
        %v199 = vld [vmem:[#allocation5] sm:$0xf]
        %v200 = vlaneseq
        %v201 = vshrl.u32 %v200, 7
        %v202 = vsub.s32 0, %v201
        %v203 = vrot.slane %v198, %v202
        %v204 = vadd.f32 %v203, %v199
        %v205 = vld [vmem:[%s173 + $0x1] sm:$0x1]
        %s206 = scalar_lea.vmem [#allocation5], 4
        %v207 = vld [vmem:[%s206] sm:$0xf]
        %v208 = vlaneseq
        %v209 = vshrl.u32 %v208, 7
        %v210 = vsub.s32 0, %v209
        %v211 = vrot.slane %v205, %v210
        %v212 = vadd.f32 %v211, %v207
        %v213 = vmax.f32 %v204, %v212
        %v214 = vld [vmem:[%s173 + $0x2] sm:$0x1]
        %s215 = scalar_lea.vmem [#allocation5], 8
        %v216 = vld [vmem:[%s215] sm:$0xf]
        %v217 = vlaneseq
        %v218 = vshrl.u32 %v217, 7
        %v219 = vsub.s32 0, %v218
        %v220 = vrot.slane %v214, %v219
        %v221 = vadd.f32 %v220, %v216
        %v222 = vmax.f32 %v213, %v221
        %v223 = vld [vmem:[%s173 + $0x3] sm:$0x1]
        %s224 = scalar_lea.vmem [#allocation5], 12
        %v225 = vld [vmem:[%s224] sm:$0xf]
        %v226 = vlaneseq
        %v227 = vshrl.u32 %v226, 7
        %v228 = vsub.s32 0, %v227
        %v229 = vrot.slane %v223, %v228
        %v230 = vadd.f32 %v229, %v225
        %v231 = vmax.f32 %v222, %v230
        %v232 = vsub.f32 %v204, %v231
        %v233 = vmul.f32 %v232, 1.442695
        %v234 = vpow.pop %v233
        %v235 = vsub.f32 %v212, %v231
        %v236 = vmul.f32 %v235, 1.442695
        %v237 = vpow.pop %v236
        %v238 = vadd.f32 %v234, %v237
        %v239 = vsub.f32 %v221, %v231
        %v240 = vmul.f32 %v239, 1.442695
        %v241 = vpow.pop %v240
        %v242 = vadd.f32 %v238, %v241
        %v243 = vsub.f32 %v230, %v231
        %v244 = vmul.f32 %v243, 1.442695
        %v245 = vpow.pop %v244
        %v246 = vadd.f32 %v242, %v245
        %v247 = vlog2.pop %v246
        %v248 = vmul.f32 %v247, 0.6931472
        %v249 = vadd.f32 %v231, %v248
        %250 = vst [vmem:[%s197] sm:$0xf] %v249
        %s251 = sand.u32 %s96, 1
        %s252 = scalar_lea.sflag [#allocation4], %s251
        %s253 = sand.u32 %s96, 1
        %s254 = smul.addr %s253, 4
        %s255 = scalar_lea.vmem [#allocation7], %s254
        // Predicated region
        $region37: #{tpu_custom_call.1} parent=27 // pred_check
          %p256 = pneg %p106
        $region38: #{tpu_custom_call.1} parent=27 // pred_check_branch
          %258 = sbr.rel (%p256) target = $region40
        $region39: #{tpu_custom_call.1} parent=27 // pred_region
          %s260 = ssub.s32 64, 64
          %261 = vsyncadd %s252, %s260
          %s262 = sadd.s32 %s25, %s24
          %s263 = smul.addr %s262, 64
          %s264 = scalar_lea.hbm %s2, %s263
          %s266 = sshll.u32 %s255, 4
          %s267 = int_to_ptr.vmem [resolvable:$true] %s266
          %269 = dma.vmem_to_hbm [thread:$0]  %s267, 64, %s264, %s252
        $region40: #{tpu_custom_call.1} parent=27 // pred_fallthru
          _
      $region28: #{tpu_custom_call.1} parent=5 // pred_fallthru
        _
      %p270 = scmp.le.s32.totalorder 2, %s15
      // Predicated region
      $region41: #{tpu_custom_call.1} parent=5 // pred_check
        %p271 = pneg %p270
      $region42: #{tpu_custom_call.1} parent=5 // pred_check_branch
        %273 = sbr.rel (%p271) target = $region44
      $region43: #{tpu_custom_call.1} parent=5 // pred_region
        %s274 = ssub.s32 %s15, 2
        // Predicated region
        $region45: #{tpu_custom_call.1} parent=43 // pred_check
          %p275 = pneg %p112
        $region46: #{tpu_custom_call.1} parent=43 // pred_check_branch
          %277 = sbr.rel (%p275) target = $region48
        $region47: #{tpu_custom_call.1} parent=43 // pred_region
          %s278 = sand.u32 %s97, 1
          %s279 = scalar_lea.sflag [#allocation4], %s278
          %s280 = sand.u32 %s97, 1
          %s281 = smul.addr %s280, 4
          %s282 = scalar_lea.vmem [#allocation7], %s281
          %283 = dma.done %s279, 64
        $region48: #{tpu_custom_call.1} parent=43 // pred_fallthru
          _
      $region44: #{tpu_custom_call.1} parent=5 // pred_fallthru
        _
    $region6: #{tpu_custom_call.1} parent=1 // loop_footer
      %s19 = sadd.s32 1, %s15
    $region7: #{tpu_custom_call.1} parent=1 // loop_footer_branch
      %14 = sbr.rel target = $region3
    $region8: #{tpu_custom_call.1} parent=1 // loop_exit
      _
    %284 = vsyncpa [#allocation3], 1
    %s285 = scalar_lea.sflag [#allocation3], 1
    %286 = vsyncpa %s285, 1
    %287 = vsyncpa [#allocation6], 1
    %288 = vsyncpa [#allocation4], 1
    %s289 = scalar_lea.sflag [#allocation4], 1
    %290 = vsyncpa %s289, 1

</llo_original>
